<compile_context>
chip_gen: v7x
topology: tpu7x:2x2x1
jax: 0.10.0
libtpu: 0.0.40
codegen_flags: <defaults>
</compile_context>

<pallas_src>
import numpy as np
import jax
import jax.numpy as jnp
from jax.experimental import pallas as pl
from jax.experimental.pallas import tpu as pltpu


_TARGET_BLOCK_BYTES = 2 * 1024 * 1024   # per activation block (before double buffering)
_VMEM_LIMIT_BYTES = 48 * 1024 * 1024    # safe on v5e/v6e (128 MiB) and v7x (64 MiB)
_MAX_NBP = 512                          # max padded blocks-per-image for the matmul path
_MAX_CONST_BYTES = 8 * 1024 * 1024      # max VMEM for the P / P^T constants (bf16)


# ----------------------------------------------------------------------------
# Kernels
# ----------------------------------------------------------------------------
def _block_relu_factored_kernel(x_ref, p_ref, pt_ref, o_ref):
    """x_ref:  (TB, L)  activations, one padded channel image per lane row.
    p_ref:  (L, NBP) bf16 0/1 block-assignment matrix (pixel -> block).
    pt_ref: (NBP, L) bf16 transpose of p_ref.
    o_ref:  x * DReLU(block sum), block sums / mask broadcast via two matmuls."""
    x = x_ref[...]
    xf = x.astype(jnp.float32)
    # bf16x3 split: h1 + h2 + h3 == xf to ~f32 precision, so the bf16 MXU
    # matmuls (f32 accumulation, P is exactly 0/1) give exact f32 block sums.
    h1 = xf.astype(jnp.bfloat16)
    r1 = xf - h1.astype(jnp.float32)
    h2 = r1.astype(jnp.bfloat16)
    h3 = (r1 - h2.astype(jnp.float32)).astype(jnp.bfloat16)
    p = p_ref[...]
    dims = (((1,), (0,)), ((), ()))
    s = jax.lax.dot_general(h1, p, dims, preferred_element_type=jnp.float32)
    s = s + jax.lax.dot_general(h2, p, dims, preferred_element_type=jnp.float32)
    s = s + jax.lax.dot_general(h3, p, dims, preferred_element_type=jnp.float32)
    # DReLU on the per-block sums, then broadcast the 0/1 mask back to every
    # pixel with one exact 0/1 matmul (each row of P^T has a single 1).
    d = (s > 0.0).astype(jnp.bfloat16)
    m = jax.lax.dot_general(d, pt_ref[...], dims, preferred_element_type=jnp.float32)
    o_ref[...] = jnp.where(m > 0.0, x, jnp.zeros_like(x))


def _block_relu_slab_kernel(x_ref, o_ref):
    """Fallback: x_ref (K, TM) -- K block elements on sublanes, TM blocks on lanes."""
    x = x_ref[...]
    s = jnp.sum(x.astype(jnp.float32), axis=0, keepdims=True)
    o_ref[...] = jnp.where(s > 0.0, x, jnp.zeros_like(x))


# ----------------------------------------------------------------------------
# pallas_call wrappers
# ----------------------------------------------------------------------------
def _choose_row_tile(n_rows, row_bytes):
    tb = max(8, (_TARGET_BLOCK_BYTES // max(row_bytes, 1)) // 8 * 8)
    if n_rows >= 16:
        # keep >= 2 grid steps so both v7x TensorCores get work
        half = ((n_rows + 1) // 2 + 7) // 8 * 8
        tb = min(tb, half)
    if tb >= n_rows:
        tb = n_rows
    return tb


def _block_assignment_matrix(Hp, Wp, bh, bw, nbp):
    """(L, nbp) 0/1 matrix mapping each (flattened) pixel to its block id."""
    rb = np.arange(Hp) // bh
    cb = np.arange(Wp) // bw
    blk_id = (rb[:, None] * (Wp // bw) + cb[None, :]).reshape(-1)      # (L,)
    P = np.zeros((Hp * Wp, nbp), dtype=np.float32)
    P[np.arange(Hp * Wp), blk_id] = 1.0
    return P


def _run_factored_kernel(x2d, Hp, Wp, bh, bw, nbp):
    B, L = x2d.shape
    p_np = _block_assignment_matrix(Hp, Wp, bh, bw, nbp)
    p = jnp.asarray(p_np, dtype=jnp.bfloat16)            # (L, NBP)
    pt = jnp.asarray(p_np.T.copy(), dtype=jnp.bfloat16)  # (NBP, L)
    tb = _choose_row_tile(B, L * x2d.dtype.itemsize)
    grid = (pl.cdiv(B, tb),)
    return pl.pallas_call(
        _block_relu_factored_kernel,
        out_shape=jax.ShapeDtypeStruct((B, L), x2d.dtype),
        grid=grid,
        in_specs=[
            pl.BlockSpec((tb, L), lambda i: (i, 0)),
            pl.BlockSpec((L, nbp), lambda i: (0, 0)),   # constant block -> fetched once
            pl.BlockSpec((nbp, L), lambda i: (0, 0)),   # constant block -> fetched once
        ],
        out_specs=pl.BlockSpec((tb, L), lambda i: (i, 0)),
        compiler_params=pltpu.CompilerParams(
            dimension_semantics=("parallel",),
            vmem_limit_bytes=_VMEM_LIMIT_BYTES,
            allow_input_fusion=[True, False, False],
        ),
    )(x2d, p, pt)


def _run_slab_kernel(x2d, Hp, Wp, bh, bw):
    # Fallback for very large images / tiny blocks where the factorized
    # matmuls would be MXU-bound and the P / P^T constants too big for VMEM.
    # Uses the (K, M) SpaceToDepth slab (host transposes).
    # TODO(synk): replace with a factorized in-kernel row/column reduction so the
    # host-side SpaceToDepth transposes disappear for large images too.
    B, L = x2d.shape
    Hb, Wb, K = Hp // bh, Wp // bw, bh * bw
    slab = (x2d.reshape(B, Hb, bh, Wb, bw)
                .transpose(0, 1, 3, 2, 4)
                .reshape(B * Hb * Wb, K).T)           # (K, M)
    M = slab.shape[1]
    tile_m = 4096 if M > 4096 else M                  # no lane padding; ragged last block
    out = pl.pallas_call(
        _block_relu_slab_kernel,
        out_shape=jax.ShapeDtypeStruct((K, M), slab.dtype),
        grid=(pl.cdiv(M, tile_m),),
        in_specs=[pl.BlockSpec((K, tile_m), lambda i: (0, i))],
        out_specs=pl.BlockSpec((K, tile_m), lambda i: (0, i)),
        compiler_params=pltpu.CompilerParams(
            dimension_semantics=("parallel",),
            vmem_limit_bytes=_VMEM_LIMIT_BYTES,
        ),
    )(slab)
    return (out.T.reshape(B, Hb, Wb, bh, bw)
               .transpose(0, 1, 3, 2, 4)
               .reshape(B, L))


# ----------------------------------------------------------------------------
# Module-level forward
# ----------------------------------------------------------------------------
def _apply_group(cur, bh, bw):
    """cur: (N, Cg, H, W) -> block ReLU with (bh, bw) blocks, same shape."""
    N, Cg, H, W = cur.shape
    pad_h = (-H) % bh
    pad_w = (-W) % bw
    if pad_h or pad_w:
        cur = jnp.pad(cur, ((0, 0), (0, 0), (0, pad_h), (0, pad_w)))
    Hp, Wp = H + pad_h, W + pad_w
    L = Hp * Wp
    nb = (Hp // bh) * (Wp // bw)
    nbp = max(128, ((nb + 127) // 128) * 128)
    const_bytes = 2 * L * nbp * 2                     # P + P^T in bf16
    x2d = cur.reshape(N * Cg, L)                      # free reshape (contiguous)
    if nbp <= _MAX_NBP and const_bytes <= _MAX_CONST_BYTES:
        y2d = _run_factored_kernel(x2d, Hp, Wp, bh, bw, nbp)
    else:
        y2d = _run_slab_kernel(x2d, Hp, Wp, bh, bw)
    y = y2d.reshape(N, Cg, Hp, Wp)
    if pad_h or pad_w:
        y = y[:, :, :H, :W]
    return y


def secure_optimized_block_relu(activation, block_sizes):
    """Functional equivalent of SecureOptimizedBlockReLU.forward.

    activation: (N, C, H, W) float array (NCHW).
    block_sizes: (C, 2) ints; channels whose block size contains 0 are identity.
    DReLU(x) = 1{x > 0}.
    """
    block_sizes = np.asarray(block_sizes)
    N, C, H, W = activation.shape
    assert block_sizes.shape == (C, 2)

    if np.all(block_sizes == np.array([0, 1])):
        return activation
    active = [bs for bs in np.unique(block_sizes, axis=0) if 0 not in bs]
    if not active:
        return activation

    parts = []
    perm = []
    for bs in active:
        bh, bw = int(bs[0]), int(bs[1])
        channels = np.where(np.all(block_sizes == bs, axis=1))[0]
        perm.extend(channels.tolist())
        parts.append(_apply_group(activation[:, channels], bh, bw))

    identity_channels = np.where(np.any(block_sizes == 0, axis=1))[0]
    if identity_channels.size:
        perm.extend(identity_channels.tolist())
        parts.append(activation[:, identity_channels])

    out = parts[0] if len(parts) == 1 else jnp.concatenate(parts, axis=1)
    perm = np.asarray(perm)
    if not np.array_equal(perm, np.arange(C)):
        out = jnp.take(out, jnp.asarray(np.argsort(perm)), axis=1)
    return out


# ----------------------------------------------------------------------------
# Pure-numpy reference (PyTorch semantics) for verification
# ----------------------------------------------------------------------------
def _reference_block_relu(x, block_sizes):
    x = np.asarray(x)
    bs_arr = np.asarray(block_sizes)
    N, C, H, W = x.shape
    out = x.copy()
    for c in range(C):
        bh, bw = int(bs_arr[c, 0]), int(bs_arr[c, 1])
        if bh == 0 or bw == 0:
            continue  # identity channel
        pad_h = (bh - H % bh) % bh
        pad_w = (bw - W % bw) % bw
        xp = np.pad(x[:, c], ((0, 0), (0, pad_h), (0, pad_w)))
        Hp, Wp = H + pad_h, W + pad_w
        for n in range(N):
            for i in range(0, Hp, bh):
                for j in range(0, Wp, bw):
                    blk = xp[n, i:i + bh, j:j + bw]
                    m = 1.0 if blk.sum() > 0 else 0.0
                    xp[n, i:i + bh, j:j + bw] = blk * m
        out[:, c] = xp[:, :H, :W]
    return out


if __name__ == "__main__":
    key = jax.random.PRNGKey(0)
    N, C, H, W = 2, 4, 16, 16
    x = jax.random.normal(key, (N, C, H, W), dtype=jnp.float32)

    # Per-channel block sizes ("parameters" of the module): two channels share
    # a 2x2 block, one identity channel [0,1], one 3x2 block (exercises
    # spatial padding since 3 does not divide 16).
    block_sizes = [[2, 2], [2, 2], [0, 1], [3, 2]]

    fn = jax.jit(lambda a: secure_optimized_block_relu(a, block_sizes))
    y = jax.block_until_ready(fn(x))

    y_ref = _reference_block_relu(np.asarray(x), block_sizes)
    np.testing.assert_allclose(np.asarray(y), y_ref, rtol=1e-5, atol=1e-5)

    print("KERNEL_OK")
</pallas_src>

<mosaic_0001>
module attributes {stable_mosaic.version = 11 : i64} {
  func.func @_block_relu_factored_kernel(%arg0: i32, %arg1: memref<2x288xf32, #tpu.memory_space<vmem>>, %arg2: memref<288x128xbf16, #tpu.memory_space<vmem>>, %arg3: memref<128x288xbf16, #tpu.memory_space<vmem>>, %arg4: memref<2x288xf32, #tpu.memory_space<vmem>>) attributes {dimension_semantics = [#tpu.dimension_semantics<parallel>], iteration_bounds = array<i64: 1>, scalar_prefetch = 0 : i64, scratch_operands = 0 : i64, tpu.core_type = #tpu.core_type<tc>, window_params = [{transform_indices = @transform_0, window_bounds = array<i64: 2, 288>}, {pipeline_mode = #tpu.pipeline_mode<synchronous>, transform_indices = @transform_1, window_bounds = array<i64: 288, 128>}, {pipeline_mode = #tpu.pipeline_mode<synchronous>, transform_indices = @transform_2, window_bounds = array<i64: 128, 288>}, {transform_indices = @transform_3, window_bounds = array<i64: 2, 288>}]} {
    %c0 = arith.constant 0 : index
    %c0_0 = arith.constant 0 : index
    %0 = vector.load %arg1[%c0, %c0_0] : memref<2x288xf32, #tpu.memory_space<vmem>>, vector<2x288xf32>
    %1 = arith.truncf %0 : vector<2x288xf32> to vector<2x288xbf16>
    %2 = arith.extf %1 : vector<2x288xbf16> to vector<2x288xf32>
    %3 = arith.subf %0, %2 : vector<2x288xf32>
    %4 = arith.truncf %3 : vector<2x288xf32> to vector<2x288xbf16>
    %5 = arith.extf %4 : vector<2x288xbf16> to vector<2x288xf32>
    %6 = arith.subf %3, %5 : vector<2x288xf32>
    %7 = arith.truncf %6 : vector<2x288xf32> to vector<2x288xbf16>
    %c0_1 = arith.constant 0 : index
    %c0_2 = arith.constant 0 : index
    %8 = vector.load %arg2[%c0_1, %c0_2] : memref<288x128xbf16, #tpu.memory_space<vmem>>, vector<288x128xbf16>
    %cst = arith.constant dense<0.000000e+00> : vector<2x128xf32>
    %9 = tpu.matmul %1, %8, %cst {dimension_numbers = #tpu.dot_dimension_numbers<[1], [0], [0], [1], [0, 0, 1, 1], [], []>} : vector<2x288xbf16>, vector<288x128xbf16>, vector<2x128xf32> -> vector<2x128xf32>
    %cst_3 = arith.constant dense<0.000000e+00> : vector<2x128xf32>
    %10 = tpu.matmul %4, %8, %cst_3 {dimension_numbers = #tpu.dot_dimension_numbers<[1], [0], [0], [1], [0, 0, 1, 1], [], []>} : vector<2x288xbf16>, vector<288x128xbf16>, vector<2x128xf32> -> vector<2x128xf32>
    %11 = arith.addf %9, %10 : vector<2x128xf32>
    %cst_4 = arith.constant dense<0.000000e+00> : vector<2x128xf32>
    %12 = tpu.matmul %7, %8, %cst_4 {dimension_numbers = #tpu.dot_dimension_numbers<[1], [0], [0], [1], [0, 0, 1, 1], [], []>} : vector<2x288xbf16>, vector<288x128xbf16>, vector<2x128xf32> -> vector<2x128xf32>
    %13 = arith.addf %11, %12 : vector<2x128xf32>
    %cst_5 = arith.constant 0.000000e+00 : f32
    %14 = vector.broadcast %cst_5 : f32 to vector<2x128xf32>
    %15 = arith.cmpf ogt, %13, %14 : vector<2x128xf32>
    %16 = arith.extui %15 : vector<2x128xi1> to vector<2x128xi32>
    %17 = arith.sitofp %16 : vector<2x128xi32> to vector<2x128xf32>
    %18 = arith.truncf %17 : vector<2x128xf32> to vector<2x128xbf16>
    %c0_6 = arith.constant 0 : index
    %c0_7 = arith.constant 0 : index
    %19 = vector.load %arg3[%c0_6, %c0_7] : memref<128x288xbf16, #tpu.memory_space<vmem>>, vector<128x288xbf16>
    %cst_8 = arith.constant dense<0.000000e+00> : vector<2x288xf32>
    %20 = tpu.matmul %18, %19, %cst_8 {dimension_numbers = #tpu.dot_dimension_numbers<[1], [0], [0], [1], [0, 0, 1, 1], [], []>} : vector<2x128xbf16>, vector<128x288xbf16>, vector<2x288xf32> -> vector<2x288xf32>
    %cst_9 = arith.constant 0.000000e+00 : f32
    %21 = vector.broadcast %cst_9 : f32 to vector<2x288xf32>
    %22 = arith.cmpf ogt, %20, %21 : vector<2x288xf32>
    %cst_10 = arith.constant 0.000000e+00 : f32
    %23 = vector.broadcast %cst_10 : f32 to vector<2x288xf32>
    %24 = arith.select %22, %0, %23 : vector<2x288xi1>, vector<2x288xf32>
    %c0_11 = arith.constant 0 : index
    %c0_12 = arith.constant 0 : index
    %25 = vector.load %arg4[%c0_11, %c0_12] : memref<2x288xf32, #tpu.memory_space<vmem>>, vector<2x288xf32>
    tpu.vector_store %arg4[%c0_11, %c0_12], %24 {strides = array<i32>} : memref<2x288xf32, #tpu.memory_space<vmem>>, vector<2x288xf32>,
    return
  }
  func.func @transform_0(%arg0: i32) -> (i32, i32) {
    %c0_i32 = arith.constant 0 : i32
    %c0_i32_0 = arith.constant 0 : i32
    return %arg0, %c0_i32 : i32, i32
  }
  func.func @transform_1(%arg0: i32) -> (i32, i32) {
    %c0_i32 = arith.constant 0 : i32
    %c0_i32_0 = arith.constant 0 : i32
    %c0_i32_1 = arith.constant 0 : i32
    return %c0_i32, %c0_i32_0 : i32, i32
  }
  func.func @transform_2(%arg0: i32) -> (i32, i32) {
    %c0_i32 = arith.constant 0 : i32
    %c0_i32_0 = arith.constant 0 : i32
    %c0_i32_1 = arith.constant 0 : i32
    return %c0_i32, %c0_i32_0 : i32, i32
  }
  func.func @transform_3(%arg0: i32) -> (i32, i32) {
    %c0_i32 = arith.constant 0 : i32
    %c0_i32_0 = arith.constant 0 : i32
    return %arg0, %c0_i32 : i32, i32
  }
}

module attributes {stable_mosaic.version = 11 : i64} {
  func.func @_block_relu_factored_kernel(%arg0: i32, %arg1: memref<4x256xf32, #tpu.memory_space<vmem>>, %arg2: memref<256x128xbf16, #tpu.memory_space<vmem>>, %arg3: memref<128x256xbf16, #tpu.memory_space<vmem>>, %arg4: memref<4x256xf32, #tpu.memory_space<vmem>>) attributes {dimension_semantics = [#tpu.dimension_semantics<parallel>], iteration_bounds = array<i64: 1>, scalar_prefetch = 0 : i64, scratch_operands = 0 : i64, tpu.core_type = #tpu.core_type<tc>, window_params = [{transform_indices = @transform_0, window_bounds = array<i64: 4, 256>}, {pipeline_mode = #tpu.pipeline_mode<synchronous>, transform_indices = @transform_1, window_bounds = array<i64: 256, 128>}, {pipeline_mode = #tpu.pipeline_mode<synchronous>, transform_indices = @transform_2, window_bounds = array<i64: 128, 256>}, {transform_indices = @transform_3, window_bounds = array<i64: 4, 256>}]} {
    %c0 = arith.constant 0 : index
    %c0_0 = arith.constant 0 : index
    %0 = vector.load %arg1[%c0, %c0_0] : memref<4x256xf32, #tpu.memory_space<vmem>>, vector<4x256xf32>
    %1 = arith.truncf %0 : vector<4x256xf32> to vector<4x256xbf16>
    %2 = arith.extf %1 : vector<4x256xbf16> to vector<4x256xf32>
    %3 = arith.subf %0, %2 : vector<4x256xf32>
    %4 = arith.truncf %3 : vector<4x256xf32> to vector<4x256xbf16>
    %5 = arith.extf %4 : vector<4x256xbf16> to vector<4x256xf32>
    %6 = arith.subf %3, %5 : vector<4x256xf32>
    %7 = arith.truncf %6 : vector<4x256xf32> to vector<4x256xbf16>
    %c0_1 = arith.constant 0 : index
    %c0_2 = arith.constant 0 : index
    %8 = vector.load %arg2[%c0_1, %c0_2] : memref<256x128xbf16, #tpu.memory_space<vmem>>, vector<256x128xbf16>
    %cst = arith.constant dense<0.000000e+00> : vector<4x128xf32>
    %9 = tpu.matmul %1, %8, %cst {dimension_numbers = #tpu.dot_dimension_numbers<[1], [0], [0], [1], [0, 0, 1, 1], [], []>} : vector<4x256xbf16>, vector<256x128xbf16>, vector<4x128xf32> -> vector<4x128xf32>
    %cst_3 = arith.constant dense<0.000000e+00> : vector<4x128xf32>
    %10 = tpu.matmul %4, %8, %cst_3 {dimension_numbers = #tpu.dot_dimension_numbers<[1], [0], [0], [1], [0, 0, 1, 1], [], []>} : vector<4x256xbf16>, vector<256x128xbf16>, vector<4x128xf32> -> vector<4x128xf32>
    %11 = arith.addf %9, %10 : vector<4x128xf32>
    %cst_4 = arith.constant dense<0.000000e+00> : vector<4x128xf32>
    %12 = tpu.matmul %7, %8, %cst_4 {dimension_numbers = #tpu.dot_dimension_numbers<[1], [0], [0], [1], [0, 0, 1, 1], [], []>} : vector<4x256xbf16>, vector<256x128xbf16>, vector<4x128xf32> -> vector<4x128xf32>
    %13 = arith.addf %11, %12 : vector<4x128xf32>
    %cst_5 = arith.constant 0.000000e+00 : f32
    %14 = vector.broadcast %cst_5 : f32 to vector<4x128xf32>
    %15 = arith.cmpf ogt, %13, %14 : vector<4x128xf32>
    %16 = arith.extui %15 : vector<4x128xi1> to vector<4x128xi32>
    %17 = arith.sitofp %16 : vector<4x128xi32> to vector<4x128xf32>
    %18 = arith.truncf %17 : vector<4x128xf32> to vector<4x128xbf16>
    %c0_6 = arith.constant 0 : index
    %c0_7 = arith.constant 0 : index
    %19 = vector.load %arg3[%c0_6, %c0_7] : memref<128x256xbf16, #tpu.memory_space<vmem>>, vector<128x256xbf16>
    %cst_8 = arith.constant dense<0.000000e+00> : vector<4x256xf32>
    %20 = tpu.matmul %18, %19, %cst_8 {dimension_numbers = #tpu.dot_dimension_numbers<[1], [0], [0], [1], [0, 0, 1, 1], [], []>} : vector<4x128xbf16>, vector<128x256xbf16>, vector<4x256xf32> -> vector<4x256xf32>
    %cst_9 = arith.constant 0.000000e+00 : f32
    %21 = vector.broadcast %cst_9 : f32 to vector<4x256xf32>
    %22 = arith.cmpf ogt, %20, %21 : vector<4x256xf32>
    %cst_10 = arith.constant 0.000000e+00 : f32
    %23 = vector.broadcast %cst_10 : f32 to vector<4x256xf32>
    %24 = arith.select %22, %0, %23 : vector<4x256xi1>, vector<4x256xf32>
    %c0_11 = arith.constant 0 : index
    %c0_12 = arith.constant 0 : index
    %25 = vector.load %arg4[%c0_11, %c0_12] : memref<4x256xf32, #tpu.memory_space<vmem>>, vector<4x256xf32>
    tpu.vector_store %arg4[%c0_11, %c0_12], %24 {strides = array<i32>} : memref<4x256xf32, #tpu.memory_space<vmem>>, vector<4x256xf32>,
    return
  }
  func.func @transform_0(%arg0: i32) -> (i32, i32) {
    %c0_i32 = arith.constant 0 : i32
    %c0_i32_0 = arith.constant 0 : i32
    return %arg0, %c0_i32 : i32, i32
  }
  func.func @transform_1(%arg0: i32) -> (i32, i32) {
    %c0_i32 = arith.constant 0 : i32
    %c0_i32_0 = arith.constant 0 : i32
    %c0_i32_1 = arith.constant 0 : i32
    return %c0_i32, %c0_i32_0 : i32, i32
  }
  func.func @transform_2(%arg0: i32) -> (i32, i32) {
    %c0_i32 = arith.constant 0 : i32
    %c0_i32_0 = arith.constant 0 : i32
    %c0_i32_1 = arith.constant 0 : i32
    return %c0_i32, %c0_i32_0 : i32, i32
  }
  func.func @transform_3(%arg0: i32) -> (i32, i32) {
    %c0_i32 = arith.constant 0 : i32
    %c0_i32_0 = arith.constant 0 : i32
    return %arg0, %c0_i32 : i32, i32
  }
}

</mosaic_0001>

<llo_original>
// kernel: _lambda_.2
$region0: #{_lambda_.2}
  #allocation0 [shape = 'u32[]', space=smem, size = 0x4, offset = 0x4, fixed_abs, tag = 'smem constant byte address 0x4 - core index']
  #allocation1 [shape = 'u32[144,128]{1,0:T(1,128)}', space=vmem, size = 0x12000, scoped, tag = 'internal scratch']
  %s0 = inlined_call_operand.vmem [shape: f32[4,256], index: 0, kind: input, shape index: {}]
  %s1 = inlined_call_operand.vmem [shape: bf16[256,128], index: 1, kind: input, shape index: {}]
  %s2 = inlined_call_operand.vmem [shape: bf16[128,256], index: 2, kind: input, shape index: {}]
  %s3 = inlined_call_operand.vmem [shape: f32[4,256], index: 3, kind: output, shape index: {}]
  %s4 = sld [smem:[#allocation0]]
  $region22: #{_lambda_.2} parent=0
    _
  %s6 = ssub.s32 1, %s4
  %s7 = scalar_select 0, %s6, %s4
  // Predicated region
  $region2: #{_lambda_.2} parent=0 // pred_check
    _
  $region3: #{_lambda_.2} parent=0 // pred_check_branch
    %9 = sbr.rel (0) target = $region5
  $region4: #{_lambda_.2} parent=0 // pred_region
    _
  $region5: #{_lambda_.2} parent=0 // pred_fallthru
    _
  // Predicated region
  $region6: #{_lambda_.2} parent=0 // pred_check
    _
  $region7: #{_lambda_.2} parent=0 // pred_check_branch
    %11 = sbr.rel (0) target = $region9
  $region8: #{_lambda_.2} parent=0 // pred_region
    _
  $region9: #{_lambda_.2} parent=0 // pred_fallthru
    _
  // Predicated region
  $region10: #{_lambda_.2} parent=0 // pred_check
    _
  $region11: #{_lambda_.2} parent=0 // pred_check_branch
    %13 = sbr.rel (0) target = $region13
  $region12: #{_lambda_.2} parent=0 // pred_region
    _
  $region13: #{_lambda_.2} parent=0 // pred_fallthru
    _
  %v15 = vld [vmem:[%s0] sm:$0xff]
  %v17 = vcombine.high %v15, %v15
  %v19 = vpack.c.bf16 %v15, %v15
  %v20 = vpack.c.bf16 %v17, %v17
  %v21 = vunpack.c.l.bf16 %v19
  %v22 = vunpack.c.l.bf16 %v20
  %v25 = vcombine.low %v21, %v22
  %v27 = vsub.f32 %v15, %v25
  %v29 = vcombine.high %v27, %v27
  %v31 = vpack.c.bf16 %v27, %v27
  %v32 = vpack.c.bf16 %v29, %v29
  %v33 = vunpack.c.l.bf16 %v31
  %v34 = vunpack.c.l.bf16 %v32
  %v37 = vcombine.low %v33, %v34
  %v39 = vsub.f32 %v27, %v37
  %v41 = vcombine.high %v39, %v39
  %v43 = vpack.c.bf16 %v39, %v39
  %v44 = vpack.c.bf16 %v41, %v41
  %v45 = vld [vmem:[%s1] sm:$0xf]
  %v46 = vld [vmem:[%s1 + $0x4] sm:$0xf]
  %v47 = vld [vmem:[%s1 + $0x8] sm:$0xf]
  %v48 = vld [vmem:[%s1 + $0xc] sm:$0xf]
  %v49 = vld [vmem:[%s1 + $0x10] sm:$0xf]
  %v50 = vld [vmem:[%s1 + $0x14] sm:$0xf]
  %v51 = vld [vmem:[%s1 + $0x18] sm:$0xf]
  %v52 = vld [vmem:[%s1 + $0x1c] sm:$0xf]
  %v53 = vld [vmem:[%s1 + $0x20] sm:$0xf]
  %v54 = vld [vmem:[%s1 + $0x24] sm:$0xf]
  %v55 = vld [vmem:[%s1 + $0x28] sm:$0xf]
  %v56 = vld [vmem:[%s1 + $0x2c] sm:$0xf]
  %v57 = vld [vmem:[%s1 + $0x30] sm:$0xf]
  %v58 = vld [vmem:[%s1 + $0x34] sm:$0xf]
  %v59 = vld [vmem:[%s1 + $0x38] sm:$0xf]
  %v60 = vld [vmem:[%s1 + $0x3c] sm:$0xf]
  %v61 = vld [vmem:[%s1 + $0x40] sm:$0xf]
  %v62 = vld [vmem:[%s1 + $0x44] sm:$0xf]
  %v63 = vld [vmem:[%s1 + $0x48] sm:$0xf]
  %v64 = vld [vmem:[%s1 + $0x4c] sm:$0xf]
  %v65 = vld [vmem:[%s1 + $0x50] sm:$0xf]
  %v66 = vld [vmem:[%s1 + $0x54] sm:$0xf]
  %v67 = vld [vmem:[%s1 + $0x58] sm:$0xf]
  %v68 = vld [vmem:[%s1 + $0x5c] sm:$0xf]
  %v69 = vld [vmem:[%s1 + $0x60] sm:$0xf]
  %v70 = vld [vmem:[%s1 + $0x64] sm:$0xf]
  %v71 = vld [vmem:[%s1 + $0x68] sm:$0xf]
  %v72 = vld [vmem:[%s1 + $0x6c] sm:$0xf]
  %v73 = vld [vmem:[%s1 + $0x70] sm:$0xf]
  %v74 = vld [vmem:[%s1 + $0x74] sm:$0xf]
  %v75 = vld [vmem:[%s1 + $0x78] sm:$0xf]
  %v76 = vld [vmem:[%s1 + $0x7c] sm:$0xf]
  %v109 = vunpack.c.l.b16 %v45
  %v110 = vunpack.c.l.b16 %v46
  %v111 = vunpack.c.l.b16 %v47
  %v112 = vunpack.c.l.b16 %v48
  %v113 = vunpack.c.l.b16 %v49
  %v114 = vunpack.c.l.b16 %v50
  %v115 = vunpack.c.l.b16 %v51
  %v116 = vunpack.c.l.b16 %v52
  %v117 = vunpack.c.l.b16 %v53
  %v118 = vunpack.c.l.b16 %v54
  %v119 = vunpack.c.l.b16 %v55
  %v120 = vunpack.c.l.b16 %v56
  %v121 = vunpack.c.l.b16 %v57
  %v122 = vunpack.c.l.b16 %v58
  %v123 = vunpack.c.l.b16 %v59
  %v124 = vunpack.c.l.b16 %v60
  %v125 = vunpack.c.l.b16 %v61
  %v126 = vunpack.c.l.b16 %v62
  %v127 = vunpack.c.l.b16 %v63
  %v128 = vunpack.c.l.b16 %v64
  %v129 = vunpack.c.l.b16 %v65
  %v130 = vunpack.c.l.b16 %v66
  %v131 = vunpack.c.l.b16 %v67
  %v132 = vunpack.c.l.b16 %v68
  %v133 = vunpack.c.l.b16 %v69
  %v134 = vunpack.c.l.b16 %v70
  %v135 = vunpack.c.l.b16 %v71
  %v136 = vunpack.c.l.b16 %v72
  %v137 = vunpack.c.l.b16 %v73
  %v138 = vunpack.c.l.b16 %v74
  %v139 = vunpack.c.l.b16 %v75
  %v140 = vunpack.c.l.b16 %v76
  %v141 = vpack.c.b16 %v110, %v109
  %v142 = vpack.c.b16 %v112, %v111
  %v143 = vpack.c.b16 %v114, %v113
  %v144 = vpack.c.b16 %v116, %v115
  %v145 = vpack.c.b16 %v118, %v117
  %v146 = vpack.c.b16 %v120, %v119
  %v147 = vpack.c.b16 %v122, %v121
  %v148 = vpack.c.b16 %v124, %v123
  %v149 = vpack.c.b16 %v126, %v125
  %v150 = vpack.c.b16 %v128, %v127
  %v151 = vpack.c.b16 %v130, %v129
  %v152 = vpack.c.b16 %v132, %v131
  %v153 = vpack.c.b16 %v134, %v133
  %v154 = vpack.c.b16 %v136, %v135
  %v155 = vpack.c.b16 %v138, %v137
  %v156 = vpack.c.b16 %v140, %v139
  %173 = vmatprep.subr.bf16.mxu0 0
  %174 = vmatpush1.bf16.msra.mxu0 %v141
  %175 = vmatprep.subr.bf16.mxu0 0
  %176 = vmatpush1.bf16.msra.mxu0 %v142
  %177 = vmatprep.subr.bf16.mxu0 0
  %178 = vmatpush1.bf16.msra.mxu0 %v143
  %179 = vmatprep.subr.bf16.mxu0 0
  %180 = vmatpush1.bf16.msra.mxu0 %v144
  %181 = vmatprep.subr.bf16.mxu0 0
  %182 = vmatpush1.bf16.msra.mxu0 %v145
  %183 = vmatprep.subr.bf16.mxu0 0
  %184 = vmatpush1.bf16.msra.mxu0 %v146
  %185 = vmatprep.subr.bf16.mxu0 0
  %186 = vmatpush1.bf16.msra.mxu0 %v147
  %187 = vmatprep.subr.bf16.mxu0 0
  %188 = vmatpush1.bf16.msra.mxu0 %v148
  %189 = vmatprep.subr.bf16.mxu0 0
  %190 = vmatpush1.bf16.msra.mxu0 %v149
  %191 = vmatprep.subr.bf16.mxu0 0
  %192 = vmatpush1.bf16.msra.mxu0 %v150
  %193 = vmatprep.subr.bf16.mxu0 0
  %194 = vmatpush1.bf16.msra.mxu0 %v151
  %195 = vmatprep.subr.bf16.mxu0 0
  %196 = vmatpush1.bf16.msra.mxu0 %v152
  %197 = vmatprep.subr.bf16.mxu0 0
  %198 = vmatpush1.bf16.msra.mxu0 %v153
  %199 = vmatprep.subr.bf16.mxu0 0
  %200 = vmatpush1.bf16.msra.mxu0 %v154
  %201 = vmatprep.subr.bf16.mxu0 0
  %202 = vmatpush1.bf16.msra.mxu0 %v155
  %203 = vmatprep.subr.bf16.mxu0 0
  %204 = vmatpush1.bf16.msra.mxu0 %v156
  %205 = vmatprep.mubr.bf16.mxu0 %v32
  %206 = vmatmul.mubr.bf16.gmra.mrb[0].mxu0 %v31
  %v207 = vpop.f32.mrb[0].mxu0
  %v208 = vadd.f32 0.0, %v207
  %v209 = vpop.f32.mrb[0].mxu0
  %v210 = vpop.f32.mrb[0].mxu0
  %v211 = vpop.f32.mrb[0].mxu0
  %212 = vdwg.mxu0
  %213 = vmatprep.subr.bf16.mxu0 0
  %214 = vmatpush1.bf16.msra.mxu0 %v141
  %215 = vmatprep.subr.bf16.mxu0 0
  %216 = vmatpush1.bf16.msra.mxu0 %v142
  %217 = vmatprep.subr.bf16.mxu0 0
  %218 = vmatpush1.bf16.msra.mxu0 %v143
  %219 = vmatprep.subr.bf16.mxu0 0
  %220 = vmatpush1.bf16.msra.mxu0 %v144
  %221 = vmatprep.subr.bf16.mxu0 0
  %222 = vmatpush1.bf16.msra.mxu0 %v145
  %223 = vmatprep.subr.bf16.mxu0 0
  %224 = vmatpush1.bf16.msra.mxu0 %v146
  %225 = vmatprep.subr.bf16.mxu0 0
  %226 = vmatpush1.bf16.msra.mxu0 %v147
  %227 = vmatprep.subr.bf16.mxu0 0
  %228 = vmatpush1.bf16.msra.mxu0 %v148
  %229 = vmatprep.subr.bf16.mxu0 0
  %230 = vmatpush1.bf16.msra.mxu0 %v149
  %231 = vmatprep.subr.bf16.mxu0 0
  %232 = vmatpush1.bf16.msra.mxu0 %v150
  %233 = vmatprep.subr.bf16.mxu0 0
  %234 = vmatpush1.bf16.msra.mxu0 %v151
  %235 = vmatprep.subr.bf16.mxu0 0
  %236 = vmatpush1.bf16.msra.mxu0 %v152
  %237 = vmatprep.subr.bf16.mxu0 0
  %238 = vmatpush1.bf16.msra.mxu0 %v153
  %239 = vmatprep.subr.bf16.mxu0 0
  %240 = vmatpush1.bf16.msra.mxu0 %v154
  %241 = vmatprep.subr.bf16.mxu0 0
  %242 = vmatpush1.bf16.msra.mxu0 %v155
  %243 = vmatprep.subr.bf16.mxu0 0
  %244 = vmatpush1.bf16.msra.mxu0 %v156
  %245 = vmatprep.mubr.bf16.mxu0 %v20
  %246 = vmatmul.mubr.bf16.gmra.mrb[0].mxu0 %v19
  %v247 = vpop.f32.mrb[0].mxu0
  %v248 = vadd.f32 %v208, %v247
  %v249 = vpop.f32.mrb[0].mxu0
  %v250 = vpop.f32.mrb[0].mxu0
  %v251 = vpop.f32.mrb[0].mxu0
  %252 = vdwg.mxu0
  %253 = vmatprep.subr.bf16.mxu0 0
  %254 = vmatpush1.bf16.msra.mxu0 %v141
  %255 = vmatprep.subr.bf16.mxu0 0
  %256 = vmatpush1.bf16.msra.mxu0 %v142
  %257 = vmatprep.subr.bf16.mxu0 0
  %258 = vmatpush1.bf16.msra.mxu0 %v143
  %259 = vmatprep.subr.bf16.mxu0 0
  %260 = vmatpush1.bf16.msra.mxu0 %v144
  %261 = vmatprep.subr.bf16.mxu0 0
  %262 = vmatpush1.bf16.msra.mxu0 %v145
  %263 = vmatprep.subr.bf16.mxu0 0
  %264 = vmatpush1.bf16.msra.mxu0 %v146
  %265 = vmatprep.subr.bf16.mxu0 0
  %266 = vmatpush1.bf16.msra.mxu0 %v147
  %267 = vmatprep.subr.bf16.mxu0 0
  %268 = vmatpush1.bf16.msra.mxu0 %v148
  %269 = vmatprep.subr.bf16.mxu0 0
  %270 = vmatpush1.bf16.msra.mxu0 %v149
  %271 = vmatprep.subr.bf16.mxu0 0
  %272 = vmatpush1.bf16.msra.mxu0 %v150
  %273 = vmatprep.subr.bf16.mxu0 0
  %274 = vmatpush1.bf16.msra.mxu0 %v151
  %275 = vmatprep.subr.bf16.mxu0 0
  %276 = vmatpush1.bf16.msra.mxu0 %v152
  %277 = vmatprep.subr.bf16.mxu0 0
  %278 = vmatpush1.bf16.msra.mxu0 %v153
  %279 = vmatprep.subr.bf16.mxu0 0
  %280 = vmatpush1.bf16.msra.mxu0 %v154
  %281 = vmatprep.subr.bf16.mxu0 0
  %282 = vmatpush1.bf16.msra.mxu0 %v155
  %283 = vmatprep.subr.bf16.mxu0 0
  %284 = vmatpush1.bf16.msra.mxu0 %v156
  %285 = vmatprep.mubr.bf16.mxu0 %v44
  %286 = vmatmul.mubr.bf16.gmra.mrb[0].mxu0 %v43
  %v287 = vpop.f32.mrb[0].mxu0
  %v288 = vadd.f32 0.0, %v287
  %v289 = vpop.f32.mrb[0].mxu0
  %v290 = vpop.f32.mrb[0].mxu0
  %v291 = vpop.f32.mrb[0].mxu0
  %292 = vdwg.mxu0
  %v293 = vadd.f32 %v248, %v288
  %vm294 = vcmp.gt.f32.partialorder %v293, 0.0
  %v295 = vsel %vm294, 1, 0
  %v296 = vcvt.s32.f32 %v295
  %v297 = vpack.c.bf16 %v296, %v296
  %v298 = vld [vmem:[%s2] sm:$0xff]
  %v299 = vld [vmem:[%s2 + $0x8] sm:$0xff]
  %v300 = vld [vmem:[%s2 + $0x10] sm:$0xff]
  %v301 = vld [vmem:[%s2 + $0x18] sm:$0xff]
  %v302 = vld [vmem:[%s2 + $0x20] sm:$0xff]
  %v303 = vld [vmem:[%s2 + $0x28] sm:$0xff]
  %v304 = vld [vmem:[%s2 + $0x30] sm:$0xff]
  %v305 = vld [vmem:[%s2 + $0x38] sm:$0xff]
  %v306 = vld [vmem:[%s2 + $0x40] sm:$0xff]
  %v307 = vld [vmem:[%s2 + $0x48] sm:$0xff]
  %v308 = vld [vmem:[%s2 + $0x50] sm:$0xff]
  %v309 = vld [vmem:[%s2 + $0x58] sm:$0xff]
  %v310 = vld [vmem:[%s2 + $0x60] sm:$0xff]
  %v311 = vld [vmem:[%s2 + $0x68] sm:$0xff]
  %v312 = vld [vmem:[%s2 + $0x70] sm:$0xff]
  %v313 = vld [vmem:[%s2 + $0x78] sm:$0xff]
  %v330 = vunpack.c.l.b16 %v298
  %v331 = vunpack.c.h.b16 %v298
  %v332 = vunpack.c.l.b16 %v299
  %v333 = vunpack.c.h.b16 %v299
  %v334 = vunpack.c.l.b16 %v300
  %v335 = vunpack.c.h.b16 %v300
  %v336 = vunpack.c.l.b16 %v301
  %v337 = vunpack.c.h.b16 %v301
  %v338 = vunpack.c.l.b16 %v302
  %v339 = vunpack.c.h.b16 %v302
  %v340 = vunpack.c.l.b16 %v303
  %v341 = vunpack.c.h.b16 %v303
  %v342 = vunpack.c.l.b16 %v304
  %v343 = vunpack.c.h.b16 %v304
  %v344 = vunpack.c.l.b16 %v305
  %v345 = vunpack.c.h.b16 %v305
  %v346 = vunpack.c.l.b16 %v306
  %v347 = vunpack.c.h.b16 %v306
  %v348 = vunpack.c.l.b16 %v307
  %v349 = vunpack.c.h.b16 %v307
  %v350 = vunpack.c.l.b16 %v308
  %v351 = vunpack.c.h.b16 %v308
  %v352 = vunpack.c.l.b16 %v309
  %v353 = vunpack.c.h.b16 %v309
  %v354 = vunpack.c.l.b16 %v310
  %v355 = vunpack.c.h.b16 %v310
  %v356 = vunpack.c.l.b16 %v311
  %v357 = vunpack.c.h.b16 %v311
  %v358 = vunpack.c.l.b16 %v312
  %v359 = vunpack.c.h.b16 %v312
  %v360 = vunpack.c.l.b16 %v313
  %v361 = vunpack.c.h.b16 %v313
  %v362 = vpack.c.b16 %v332, %v330
  %v363 = vpack.c.b16 %v333, %v331
  %v364 = vpack.c.b16 %v336, %v334
  %v365 = vpack.c.b16 %v337, %v335
  %v366 = vpack.c.b16 %v340, %v338
  %v367 = vpack.c.b16 %v341, %v339
  %v368 = vpack.c.b16 %v344, %v342
  %v369 = vpack.c.b16 %v345, %v343
  %v370 = vpack.c.b16 %v348, %v346
  %v371 = vpack.c.b16 %v349, %v347
  %v372 = vpack.c.b16 %v352, %v350
  %v373 = vpack.c.b16 %v353, %v351
  %v374 = vpack.c.b16 %v356, %v354
  %v375 = vpack.c.b16 %v357, %v355
  %v376 = vpack.c.b16 %v360, %v358
  %v377 = vpack.c.b16 %v361, %v359
  %394 = vmatprep.subr.bf16.mxu0 %v363
  %395 = vmatpush1.bf16.msra.mxu0 %v362
  %396 = vmatprep.subr.bf16.mxu0 %v365
  %397 = vmatpush1.bf16.msra.mxu0 %v364
  %398 = vmatprep.subr.bf16.mxu0 %v367
  %399 = vmatpush1.bf16.msra.mxu0 %v366
  %400 = vmatprep.subr.bf16.mxu0 %v369
  %401 = vmatpush1.bf16.msra.mxu0 %v368
  %402 = vmatprep.subr.bf16.mxu0 %v371
  %403 = vmatpush1.bf16.msra.mxu0 %v370
  %404 = vmatprep.subr.bf16.mxu0 %v373
  %405 = vmatpush1.bf16.msra.mxu0 %v372
  %406 = vmatprep.subr.bf16.mxu0 %v375
  %407 = vmatpush1.bf16.msra.mxu0 %v374
  %408 = vmatprep.subr.bf16.mxu0 %v377
  %409 = vmatpush1.bf16.msra.mxu0 %v376
  %410 = vmatprep.subr.bf16.mxu0 0
  %411 = vmatpush1.bf16.msra.mxu0 0
  %412 = vmatprep.subr.bf16.mxu0 0
  %413 = vmatpush1.bf16.msra.mxu0 0
  %414 = vmatprep.subr.bf16.mxu0 0
  %415 = vmatpush1.bf16.msra.mxu0 0
  %416 = vmatprep.subr.bf16.mxu0 0
  %417 = vmatpush1.bf16.msra.mxu0 0
  %418 = vmatprep.subr.bf16.mxu0 0
  %419 = vmatpush1.bf16.msra.mxu0 0
  %420 = vmatprep.subr.bf16.mxu0 0
  %421 = vmatpush1.bf16.msra.mxu0 0
  %422 = vmatprep.subr.bf16.mxu0 0
  %423 = vmatpush1.bf16.msra.mxu0 0
  %424 = vmatprep.subr.bf16.mxu0 0
  %425 = vmatpush1.bf16.msra.mxu0 0
  %426 = vmatprep.mubr.bf16.mxu0 0
  %427 = vmatmul.mubr.bf16.gmra.mrb[0].mxu0 %v297
  %v428 = vpop.f32.mrb[0].mxu0
  %v429 = vadd.f32 0.0, %v428
  %v430 = vpop.f32.mrb[0].mxu0
  %v431 = vadd.f32 0.0, %v430
  %v432 = vpop.f32.mrb[0].mxu0
  %v433 = vpop.f32.mrb[0].mxu0
  %434 = vdwg.mxu0
  %vm435 = vcmp.gt.f32.partialorder %v429, 0.0
  %vm436 = vcmp.gt.f32.partialorder %v431, 0.0
  %v437 = vsel %vm435, %v15, 0.0
  %v438 = vsel %vm436, %v17, 0.0
  %v441 = vcombine.low %v437, %v438
  %443 = vst [vmem:[%s3] sm:$0xff] %v441
  // Predicated region
  $region14: #{_lambda_.2} parent=0 // pred_check
    _
  $region15: #{_lambda_.2} parent=0 // pred_check_branch
    %445 = sbr.rel (0) target = $region17
  $region16: #{_lambda_.2} parent=0 // pred_region
    _
  $region17: #{_lambda_.2} parent=0 // pred_fallthru
    _
  // Predicated region
  $region18: #{_lambda_.2} parent=0 // pred_check
    _
  $region19: #{_lambda_.2} parent=0 // pred_check_branch
    %447 = sbr.rel (0) target = $region21
  $region20: #{_lambda_.2} parent=0 // pred_region
    _
  $region21: #{_lambda_.2} parent=0 // pred_fallthru
    _

// kernel: _lambda_.3
$region0: #{_lambda_.3}
  #allocation0 [shape = 'u32[]', space=smem, size = 0x4, offset = 0x4, fixed_abs, tag = 'smem constant byte address 0x4 - core index']
  #allocation1 [shape = 'u32[144,128]{1,0:T(1,128)}', space=vmem, size = 0x12000, scoped, tag = 'internal scratch']
  %s0 = inlined_call_operand.vmem [shape: f32[2,288], index: 0, kind: input, shape index: {}]
  %s1 = inlined_call_operand.vmem [shape: bf16[288,128], index: 1, kind: input, shape index: {}]
  %s2 = inlined_call_operand.vmem [shape: bf16[128,288], index: 2, kind: input, shape index: {}]
  %s3 = inlined_call_operand.vmem [shape: f32[2,288], index: 3, kind: output, shape index: {}]
  %s4 = sld [smem:[#allocation0]]
  $region22: #{_lambda_.3} parent=0
    _
  %s6 = ssub.s32 1, %s4
  %s7 = scalar_select 0, %s6, %s4
  // Predicated region
  $region2: #{_lambda_.3} parent=0 // pred_check
    _
  $region3: #{_lambda_.3} parent=0 // pred_check_branch
    %9 = sbr.rel (0) target = $region5
  $region4: #{_lambda_.3} parent=0 // pred_region
    _
  $region5: #{_lambda_.3} parent=0 // pred_fallthru
    _
  // Predicated region
  $region6: #{_lambda_.3} parent=0 // pred_check
    _
  $region7: #{_lambda_.3} parent=0 // pred_check_branch
    %11 = sbr.rel (0) target = $region9
  $region8: #{_lambda_.3} parent=0 // pred_region
    _
  $region9: #{_lambda_.3} parent=0 // pred_fallthru
    _
  // Predicated region
  $region10: #{_lambda_.3} parent=0 // pred_check
    _
  $region11: #{_lambda_.3} parent=0 // pred_check_branch
    %13 = sbr.rel (0) target = $region13
  $region12: #{_lambda_.3} parent=0 // pred_region
    _
  $region13: #{_lambda_.3} parent=0 // pred_fallthru
    _
  %v15 = vld [vmem:[%s0] sm:$0x3f]
  %v17 = vcombine.high %v15, %v15
  %v19 = vunpack.c.l.s4 1983009808
  %v20 = vunpack.c.0.s8 %v19
  %v21 = vlaneseq
  %v22 = vshrl.u32 %v21, 7
  %v23 = vsub.s32 %v20, %v22
  %v24 = vrot.slane %v15, %v23
  %v26 = vunpack.c.l.s4 1983009808
  %v27 = vunpack.c.0.s8 %v26
  %v28 = vlaneseq
  %v29 = vshrl.u32 %v28, 7
  %v30 = vsub.s32 %v27, %v29
  %v31 = vrot.slane %v17, %v30
  %v32 = vcombine.high %v24, %v24
  %v36 = vpack.c.bf16 %v24, %v24
  %v37 = vpack.c.bf16 %v32, %v32
  %v38 = vpack.c.bf16 %v31, %v31
  %v39 = vunpack.c.l.bf16 %v36
  %v40 = vunpack.c.l.bf16 %v37
  %v41 = vunpack.c.l.bf16 %v38
  %v45 = vcombine.low %v39, %v40
  %v47 = vunpack.c.l.s4 1983009808
  %v48 = vunpack.c.0.s8 %v47
  %v49 = vlaneseq
  %v50 = vshrl.u32 %v49, 7
  %v51 = vsub.s32 %v48, %v50
  %v52 = vrot.slane %v45, %v51
  %v54 = vunpack.c.l.s4 1983009808
  %v55 = vunpack.c.0.s8 %v54
  %v56 = vlaneseq
  %v57 = vshrl.u32 %v56, 7
  %v58 = vsub.s32 %v55, %v57
  %v59 = vrot.slane %v41, %v58
  %v60 = vcombine.low %v52, %v59
  %v62 = vsub.f32 %v15, %v60
  %v64 = vcombine.high %v62, %v62
  %v66 = vunpack.c.l.s4 1983009808
  %v67 = vunpack.c.0.s8 %v66
  %v68 = vlaneseq
  %v69 = vshrl.u32 %v68, 7
  %v70 = vsub.s32 %v67, %v69
  %v71 = vrot.slane %v62, %v70
  %v73 = vunpack.c.l.s4 1983009808
  %v74 = vunpack.c.0.s8 %v73
  %v75 = vlaneseq
  %v76 = vshrl.u32 %v75, 7
  %v77 = vsub.s32 %v74, %v76
  %v78 = vrot.slane %v64, %v77
  %v79 = vcombine.high %v71, %v71
  %v83 = vpack.c.bf16 %v71, %v71
  %v84 = vpack.c.bf16 %v79, %v79
  %v85 = vpack.c.bf16 %v78, %v78
  %v86 = vunpack.c.l.bf16 %v83
  %v87 = vunpack.c.l.bf16 %v84
  %v88 = vunpack.c.l.bf16 %v85
  %v92 = vcombine.low %v86, %v87
  %v94 = vunpack.c.l.s4 1983009808
  %v95 = vunpack.c.0.s8 %v94
  %v96 = vlaneseq
  %v97 = vshrl.u32 %v96, 7
  %v98 = vsub.s32 %v95, %v97
  %v99 = vrot.slane %v92, %v98
  %v101 = vunpack.c.l.s4 1983009808
  %v102 = vunpack.c.0.s8 %v101
  %v103 = vlaneseq
  %v104 = vshrl.u32 %v103, 7
  %v105 = vsub.s32 %v102, %v104
  %v106 = vrot.slane %v88, %v105
  %v107 = vcombine.low %v99, %v106
  %v109 = vsub.f32 %v62, %v107
  %v111 = vcombine.high %v109, %v109
  %v113 = vunpack.c.l.s4 1983009808
  %v114 = vunpack.c.0.s8 %v113
  %v115 = vlaneseq
  %v116 = vshrl.u32 %v115, 7
  %v117 = vsub.s32 %v114, %v116
  %v118 = vrot.slane %v109, %v117
  %v120 = vunpack.c.l.s4 1983009808
  %v121 = vunpack.c.0.s8 %v120
  %v122 = vlaneseq
  %v123 = vshrl.u32 %v122, 7
  %v124 = vsub.s32 %v121, %v123
  %v125 = vrot.slane %v111, %v124
  %v126 = vcombine.high %v118, %v118
  %v130 = vpack.c.bf16 %v118, %v118
  %v131 = vpack.c.bf16 %v126, %v126
  %v132 = vpack.c.bf16 %v125, %v125
  %v133 = vld [vmem:[%s1] sm:$0xf]
  %v134 = vld [vmem:[%s1 + $0x4] sm:$0xf]
  %v135 = vld [vmem:[%s1 + $0x8] sm:$0xf]
  %v136 = vld [vmem:[%s1 + $0xc] sm:$0xf]
  %v137 = vld [vmem:[%s1 + $0x10] sm:$0xf]
  %v138 = vld [vmem:[%s1 + $0x14] sm:$0xf]
  %v139 = vld [vmem:[%s1 + $0x18] sm:$0xf]
  %v140 = vld [vmem:[%s1 + $0x1c] sm:$0xf]
  %v141 = vld [vmem:[%s1 + $0x20] sm:$0xf]
  %v142 = vld [vmem:[%s1 + $0x24] sm:$0xf]
  %v143 = vld [vmem:[%s1 + $0x28] sm:$0xf]
  %v144 = vld [vmem:[%s1 + $0x2c] sm:$0xf]
  %v145 = vld [vmem:[%s1 + $0x30] sm:$0xf]
  %v146 = vld [vmem:[%s1 + $0x34] sm:$0xf]
  %v147 = vld [vmem:[%s1 + $0x38] sm:$0xf]
  %v148 = vld [vmem:[%s1 + $0x3c] sm:$0xf]
  %v149 = vld [vmem:[%s1 + $0x40] sm:$0xf]
  %v150 = vld [vmem:[%s1 + $0x44] sm:$0xf]
  %v151 = vld [vmem:[%s1 + $0x48] sm:$0xf]
  %v152 = vld [vmem:[%s1 + $0x4c] sm:$0xf]
  %v153 = vld [vmem:[%s1 + $0x50] sm:$0xf]
  %v154 = vld [vmem:[%s1 + $0x54] sm:$0xf]
  %v155 = vld [vmem:[%s1 + $0x58] sm:$0xf]
  %v156 = vld [vmem:[%s1 + $0x5c] sm:$0xf]
  %v157 = vld [vmem:[%s1 + $0x60] sm:$0xf]
  %v158 = vld [vmem:[%s1 + $0x64] sm:$0xf]
  %v159 = vld [vmem:[%s1 + $0x68] sm:$0xf]
  %v160 = vld [vmem:[%s1 + $0x6c] sm:$0xf]
  %v161 = vld [vmem:[%s1 + $0x70] sm:$0xf]
  %v162 = vld [vmem:[%s1 + $0x74] sm:$0xf]
  %v163 = vld [vmem:[%s1 + $0x78] sm:$0xf]
  %v164 = vld [vmem:[%s1 + $0x7c] sm:$0xf]
  %v165 = vld [vmem:[%s1 + $0x80] sm:$0xf]
  %v166 = vld [vmem:[%s1 + $0x84] sm:$0xf]
  %v167 = vld [vmem:[%s1 + $0x88] sm:$0xf]
  %v168 = vld [vmem:[%s1 + $0x8c] sm:$0xf]
  %v205 = vunpack.c.l.b16 %v133
  %v206 = vunpack.c.l.b16 %v134
  %v207 = vunpack.c.l.b16 %v135
  %v208 = vunpack.c.l.b16 %v136
  %v209 = vunpack.c.l.b16 %v137
  %v210 = vunpack.c.l.b16 %v138
  %v211 = vunpack.c.l.b16 %v139
  %v212 = vunpack.c.l.b16 %v140
  %v213 = vunpack.c.l.b16 %v141
  %v214 = vunpack.c.l.b16 %v142
  %v215 = vunpack.c.l.b16 %v143
  %v216 = vunpack.c.l.b16 %v144
  %v217 = vunpack.c.l.b16 %v145
  %v218 = vunpack.c.l.b16 %v146
  %v219 = vunpack.c.l.b16 %v147
  %v220 = vunpack.c.l.b16 %v148
  %v221 = vunpack.c.l.b16 %v149
  %v222 = vunpack.c.l.b16 %v150
  %v223 = vunpack.c.l.b16 %v151
  %v224 = vunpack.c.l.b16 %v152
  %v225 = vunpack.c.l.b16 %v153
  %v226 = vunpack.c.l.b16 %v154
  %v227 = vunpack.c.l.b16 %v155
  %v228 = vunpack.c.l.b16 %v156
  %v229 = vunpack.c.l.b16 %v157
  %v230 = vunpack.c.l.b16 %v158
  %v231 = vunpack.c.l.b16 %v159
  %v232 = vunpack.c.l.b16 %v160
  %v233 = vunpack.c.l.b16 %v161
  %v234 = vunpack.c.l.b16 %v162
  %v235 = vunpack.c.l.b16 %v163
  %v236 = vunpack.c.l.b16 %v164
  %v237 = vunpack.c.l.b16 %v165
  %v238 = vunpack.c.l.b16 %v166
  %v239 = vunpack.c.l.b16 %v167
  %v240 = vunpack.c.l.b16 %v168
  %v241 = vpack.c.b16 %v206, %v205
  %v242 = vpack.c.b16 %v208, %v207
  %v243 = vpack.c.b16 %v210, %v209
  %v244 = vpack.c.b16 %v212, %v211
  %v245 = vpack.c.b16 %v214, %v213
  %v246 = vpack.c.b16 %v216, %v215
  %v247 = vpack.c.b16 %v218, %v217
  %v248 = vpack.c.b16 %v220, %v219
  %v249 = vpack.c.b16 %v222, %v221
  %v250 = vpack.c.b16 %v224, %v223
  %v251 = vpack.c.b16 %v226, %v225
  %v252 = vpack.c.b16 %v228, %v227
  %v253 = vpack.c.b16 %v230, %v229
  %v254 = vpack.c.b16 %v232, %v231
  %v255 = vpack.c.b16 %v234, %v233
  %v256 = vpack.c.b16 %v236, %v235
  %v257 = vpack.c.b16 %v238, %v237
  %v258 = vpack.c.b16 %v240, %v239
  %vm277 = vcmask 261120
  %v279 = vsel %vm277, %v85, 0
  %281 = vmatprep.subr.bf16.mxu0 0
  %282 = vmatpush1.bf16.msra.mxu0 %v241
  %283 = vmatprep.subr.bf16.mxu0 0
  %284 = vmatpush1.bf16.msra.mxu0 %v242
  %285 = vmatprep.subr.bf16.mxu0 0
  %286 = vmatpush1.bf16.msra.mxu0 %v243
  %287 = vmatprep.subr.bf16.mxu0 0
  %288 = vmatpush1.bf16.msra.mxu0 %v244
  %289 = vmatprep.subr.bf16.mxu0 0
  %290 = vmatpush1.bf16.msra.mxu0 %v245
  %291 = vmatprep.subr.bf16.mxu0 0
  %292 = vmatpush1.bf16.msra.mxu0 %v246
  %293 = vmatprep.subr.bf16.mxu0 0
  %294 = vmatpush1.bf16.msra.mxu0 %v247
  %295 = vmatprep.subr.bf16.mxu0 0
  %296 = vmatpush1.bf16.msra.mxu0 %v248
  %297 = vmatprep.subr.bf16.mxu0 0
  %298 = vmatpush1.bf16.msra.mxu0 %v249
  %299 = vmatprep.subr.bf16.mxu0 0
  %300 = vmatpush1.bf16.msra.mxu0 %v250
  %301 = vmatprep.subr.bf16.mxu0 0
  %302 = vmatpush1.bf16.msra.mxu0 %v251
  %303 = vmatprep.subr.bf16.mxu0 0
  %304 = vmatpush1.bf16.msra.mxu0 %v252
  %305 = vmatprep.subr.bf16.mxu0 0
  %306 = vmatpush1.bf16.msra.mxu0 %v253
  %307 = vmatprep.subr.bf16.mxu0 0
  %308 = vmatpush1.bf16.msra.mxu0 %v254
  %309 = vmatprep.subr.bf16.mxu0 0
  %310 = vmatpush1.bf16.msra.mxu0 %v255
  %311 = vmatprep.subr.bf16.mxu0 0
  %312 = vmatpush1.bf16.msra.mxu0 %v256
  %313 = vmatprep.mubr.bf16.mxu0 %v84
  %314 = vmatmul.mubr.bf16.gmra.mrb[0].mxu0 %v83
  %v315 = vpop.f32.mrb[0].mxu0
  %v316 = vadd.f32 0.0, %v315
  %v317 = vpop.f32.mrb[0].mxu0
  %v318 = vpop.f32.mrb[0].mxu0
  %v319 = vpop.f32.mrb[0].mxu0
  %320 = vdwg.mxu0
  %321 = vmatprep.subr.bf16.mxu0 0
  %322 = vmatpush1.bf16.msra.mxu0 %v257
  %323 = vmatprep.subr.bf16.mxu0 0
  %324 = vmatpush1.bf16.msra.mxu0 %v258
  %325 = vmatprep.subr.bf16.mxu0 0
  %326 = vmatpush1.bf16.msra.mxu0 0
  %327 = vmatprep.subr.bf16.mxu0 0
  %328 = vmatpush1.bf16.msra.mxu0 0
  %329 = vmatprep.subr.bf16.mxu0 0
  %330 = vmatpush1.bf16.msra.mxu0 0
  %331 = vmatprep.subr.bf16.mxu0 0
  %332 = vmatpush1.bf16.msra.mxu0 0
  %333 = vmatprep.subr.bf16.mxu0 0
  %334 = vmatpush1.bf16.msra.mxu0 0
  %335 = vmatprep.subr.bf16.mxu0 0
  %336 = vmatpush1.bf16.msra.mxu0 0
  %337 = vmatprep.subr.bf16.mxu0 0
  %338 = vmatpush1.bf16.msra.mxu0 0
  %339 = vmatprep.subr.bf16.mxu0 0
  %340 = vmatpush1.bf16.msra.mxu0 0
  %341 = vmatprep.subr.bf16.mxu0 0
  %342 = vmatpush1.bf16.msra.mxu0 0
  %343 = vmatprep.subr.bf16.mxu0 0
  %344 = vmatpush1.bf16.msra.mxu0 0
  %345 = vmatprep.subr.bf16.mxu0 0
  %346 = vmatpush1.bf16.msra.mxu0 0
  %347 = vmatprep.subr.bf16.mxu0 0
  %348 = vmatpush1.bf16.msra.mxu0 0
  %349 = vmatprep.subr.bf16.mxu0 0
  %350 = vmatpush1.bf16.msra.mxu0 0
  %351 = vmatprep.subr.bf16.mxu0 0
  %352 = vmatpush1.bf16.msra.mxu0 0
  %353 = vmatprep.mubr.bf16.mxu0 0
  %354 = vmatmul.mubr.bf16.gmra.mrb[0].mxu0 %v279
  %v355 = vpop.f32.mrb[0].mxu0
  %v356 = vadd.f32 %v316, %v355
  %v357 = vpop.f32.mrb[0].mxu0
  %v358 = vpop.f32.mrb[0].mxu0
  %v359 = vpop.f32.mrb[0].mxu0
  %360 = vdwg.mxu0
  %v362 = vsel %vm277, %v38, 0
  %364 = vmatprep.subr.bf16.mxu0 0
  %365 = vmatpush1.bf16.msra.mxu0 %v241
  %366 = vmatprep.subr.bf16.mxu0 0
  %367 = vmatpush1.bf16.msra.mxu0 %v242
  %368 = vmatprep.subr.bf16.mxu0 0
  %369 = vmatpush1.bf16.msra.mxu0 %v243
  %370 = vmatprep.subr.bf16.mxu0 0
  %371 = vmatpush1.bf16.msra.mxu0 %v244
  %372 = vmatprep.subr.bf16.mxu0 0
  %373 = vmatpush1.bf16.msra.mxu0 %v245
  %374 = vmatprep.subr.bf16.mxu0 0
  %375 = vmatpush1.bf16.msra.mxu0 %v246
  %376 = vmatprep.subr.bf16.mxu0 0
  %377 = vmatpush1.bf16.msra.mxu0 %v247
  %378 = vmatprep.subr.bf16.mxu0 0
  %379 = vmatpush1.bf16.msra.mxu0 %v248
  %380 = vmatprep.subr.bf16.mxu0 0
  %381 = vmatpush1.bf16.msra.mxu0 %v249
  %382 = vmatprep.subr.bf16.mxu0 0
  %383 = vmatpush1.bf16.msra.mxu0 %v250
  %384 = vmatprep.subr.bf16.mxu0 0
  %385 = vmatpush1.bf16.msra.mxu0 %v251
  %386 = vmatprep.subr.bf16.mxu0 0
  %387 = vmatpush1.bf16.msra.mxu0 %v252
  %388 = vmatprep.subr.bf16.mxu0 0
  %389 = vmatpush1.bf16.msra.mxu0 %v253
  %390 = vmatprep.subr.bf16.mxu0 0
  %391 = vmatpush1.bf16.msra.mxu0 %v254
  %392 = vmatprep.subr.bf16.mxu0 0
  %393 = vmatpush1.bf16.msra.mxu0 %v255
  %394 = vmatprep.subr.bf16.mxu0 0
  %395 = vmatpush1.bf16.msra.mxu0 %v256
  %396 = vmatprep.mubr.bf16.mxu0 %v37
  %397 = vmatmul.mubr.bf16.gmra.mrb[0].mxu0 %v36
  %v398 = vpop.f32.mrb[0].mxu0
  %v399 = vadd.f32 %v356, %v398
  %v400 = vpop.f32.mrb[0].mxu0
  %v401 = vpop.f32.mrb[0].mxu0
  %v402 = vpop.f32.mrb[0].mxu0
  %403 = vdwg.mxu0
  %404 = vmatprep.subr.bf16.mxu0 0
  %405 = vmatpush1.bf16.msra.mxu0 %v257
  %406 = vmatprep.subr.bf16.mxu0 0
  %407 = vmatpush1.bf16.msra.mxu0 %v258
  %408 = vmatprep.subr.bf16.mxu0 0
  %409 = vmatpush1.bf16.msra.mxu0 0
  %410 = vmatprep.subr.bf16.mxu0 0
  %411 = vmatpush1.bf16.msra.mxu0 0
  %412 = vmatprep.subr.bf16.mxu0 0
  %413 = vmatpush1.bf16.msra.mxu0 0
  %414 = vmatprep.subr.bf16.mxu0 0
  %415 = vmatpush1.bf16.msra.mxu0 0
  %416 = vmatprep.subr.bf16.mxu0 0
  %417 = vmatpush1.bf16.msra.mxu0 0
  %418 = vmatprep.subr.bf16.mxu0 0
  %419 = vmatpush1.bf16.msra.mxu0 0
  %420 = vmatprep.subr.bf16.mxu0 0
  %421 = vmatpush1.bf16.msra.mxu0 0
  %422 = vmatprep.subr.bf16.mxu0 0
  %423 = vmatpush1.bf16.msra.mxu0 0
  %424 = vmatprep.subr.bf16.mxu0 0
  %425 = vmatpush1.bf16.msra.mxu0 0
  %426 = vmatprep.subr.bf16.mxu0 0
  %427 = vmatpush1.bf16.msra.mxu0 0
  %428 = vmatprep.subr.bf16.mxu0 0
  %429 = vmatpush1.bf16.msra.mxu0 0
  %430 = vmatprep.subr.bf16.mxu0 0
  %431 = vmatpush1.bf16.msra.mxu0 0
  %432 = vmatprep.subr.bf16.mxu0 0
  %433 = vmatpush1.bf16.msra.mxu0 0
  %434 = vmatprep.subr.bf16.mxu0 0
  %435 = vmatpush1.bf16.msra.mxu0 0
  %436 = vmatprep.mubr.bf16.mxu0 0
  %437 = vmatmul.mubr.bf16.gmra.mrb[0].mxu0 %v362
  %v438 = vpop.f32.mrb[0].mxu0
  %v439 = vadd.f32 %v399, %v438
  %v440 = vpop.f32.mrb[0].mxu0
  %v441 = vpop.f32.mrb[0].mxu0
  %v442 = vpop.f32.mrb[0].mxu0
  %443 = vdwg.mxu0
  %v445 = vsel %vm277, %v132, 0
  %447 = vmatprep.subr.bf16.mxu0 0
  %448 = vmatpush1.bf16.msra.mxu0 %v241
  %449 = vmatprep.subr.bf16.mxu0 0
  %450 = vmatpush1.bf16.msra.mxu0 %v242
  %451 = vmatprep.subr.bf16.mxu0 0
  %452 = vmatpush1.bf16.msra.mxu0 %v243
  %453 = vmatprep.subr.bf16.mxu0 0
  %454 = vmatpush1.bf16.msra.mxu0 %v244
  %455 = vmatprep.subr.bf16.mxu0 0
  %456 = vmatpush1.bf16.msra.mxu0 %v245
  %457 = vmatprep.subr.bf16.mxu0 0
  %458 = vmatpush1.bf16.msra.mxu0 %v246
  %459 = vmatprep.subr.bf16.mxu0 0
  %460 = vmatpush1.bf16.msra.mxu0 %v247
  %461 = vmatprep.subr.bf16.mxu0 0
  %462 = vmatpush1.bf16.msra.mxu0 %v248
  %463 = vmatprep.subr.bf16.mxu0 0
  %464 = vmatpush1.bf16.msra.mxu0 %v249
  %465 = vmatprep.subr.bf16.mxu0 0
  %466 = vmatpush1.bf16.msra.mxu0 %v250
  %467 = vmatprep.subr.bf16.mxu0 0
  %468 = vmatpush1.bf16.msra.mxu0 %v251
  %469 = vmatprep.subr.bf16.mxu0 0
  %470 = vmatpush1.bf16.msra.mxu0 %v252
  %471 = vmatprep.subr.bf16.mxu0 0
  %472 = vmatpush1.bf16.msra.mxu0 %v253
  %473 = vmatprep.subr.bf16.mxu0 0
  %474 = vmatpush1.bf16.msra.mxu0 %v254
  %475 = vmatprep.subr.bf16.mxu0 0
  %476 = vmatpush1.bf16.msra.mxu0 %v255
  %477 = vmatprep.subr.bf16.mxu0 0
  %478 = vmatpush1.bf16.msra.mxu0 %v256
  %479 = vmatprep.mubr.bf16.mxu0 %v131
  %480 = vmatmul.mubr.bf16.gmra.mrb[0].mxu0 %v130
  %v481 = vpop.f32.mrb[0].mxu0
  %v482 = vadd.f32 0.0, %v481
  %v483 = vpop.f32.mrb[0].mxu0
  %v484 = vpop.f32.mrb[0].mxu0
  %v485 = vpop.f32.mrb[0].mxu0
  %486 = vdwg.mxu0
  %487 = vmatprep.subr.bf16.mxu0 0
  %488 = vmatpush1.bf16.msra.mxu0 %v257
  %489 = vmatprep.subr.bf16.mxu0 0
  %490 = vmatpush1.bf16.msra.mxu0 %v258
  %491 = vmatprep.subr.bf16.mxu0 0
  %492 = vmatpush1.bf16.msra.mxu0 0
  %493 = vmatprep.subr.bf16.mxu0 0
  %494 = vmatpush1.bf16.msra.mxu0 0
  %495 = vmatprep.subr.bf16.mxu0 0
  %496 = vmatpush1.bf16.msra.mxu0 0
  %497 = vmatprep.subr.bf16.mxu0 0
  %498 = vmatpush1.bf16.msra.mxu0 0
  %499 = vmatprep.subr.bf16.mxu0 0
  %500 = vmatpush1.bf16.msra.mxu0 0
  %501 = vmatprep.subr.bf16.mxu0 0
  %502 = vmatpush1.bf16.msra.mxu0 0
  %503 = vmatprep.subr.bf16.mxu0 0
  %504 = vmatpush1.bf16.msra.mxu0 0
  %505 = vmatprep.subr.bf16.mxu0 0
  %506 = vmatpush1.bf16.msra.mxu0 0
  %507 = vmatprep.subr.bf16.mxu0 0
  %508 = vmatpush1.bf16.msra.mxu0 0
  %509 = vmatprep.subr.bf16.mxu0 0
  %510 = vmatpush1.bf16.msra.mxu0 0
  %511 = vmatprep.subr.bf16.mxu0 0
  %512 = vmatpush1.bf16.msra.mxu0 0
  %513 = vmatprep.subr.bf16.mxu0 0
  %514 = vmatpush1.bf16.msra.mxu0 0
  %515 = vmatprep.subr.bf16.mxu0 0
  %516 = vmatpush1.bf16.msra.mxu0 0
  %517 = vmatprep.subr.bf16.mxu0 0
  %518 = vmatpush1.bf16.msra.mxu0 0
  %519 = vmatprep.mubr.bf16.mxu0 0
  %520 = vmatmul.mubr.bf16.gmra.mrb[0].mxu0 %v445
  %v521 = vpop.f32.mrb[0].mxu0
  %v522 = vadd.f32 %v482, %v521
  %v523 = vpop.f32.mrb[0].mxu0
  %v524 = vpop.f32.mrb[0].mxu0
  %v525 = vpop.f32.mrb[0].mxu0
  %526 = vdwg.mxu0
  %v527 = vadd.f32 %v439, %v522
  %vm528 = vcmp.gt.f32.partialorder %v527, 0.0
  %v529 = vsel %vm528, 1, 0
  %v530 = vcvt.s32.f32 %v529
  %v531 = vpack.c.bf16 %v530, %v530
  %v532 = vld [vmem:[%s2] sm:$0xff]
  %v533 = vld [vmem:[%s2 + $0x8] sm:$0xf]
  %v534 = vld [vmem:[%s2 + $0xc] sm:$0xff]
  %v535 = vld [vmem:[%s2 + $0x14] sm:$0xf]
  %v536 = vld [vmem:[%s2 + $0x18] sm:$0xff]
  %v537 = vld [vmem:[%s2 + $0x20] sm:$0xf]
  %v538 = vld [vmem:[%s2 + $0x24] sm:$0xff]
  %v539 = vld [vmem:[%s2 + $0x2c] sm:$0xf]
  %v540 = vld [vmem:[%s2 + $0x30] sm:$0xff]
  %v541 = vld [vmem:[%s2 + $0x38] sm:$0xf]
  %v542 = vld [vmem:[%s2 + $0x3c] sm:$0xff]
  %v543 = vld [vmem:[%s2 + $0x44] sm:$0xf]
  %v544 = vld [vmem:[%s2 + $0x48] sm:$0xff]
  %v545 = vld [vmem:[%s2 + $0x50] sm:$0xf]
  %v546 = vld [vmem:[%s2 + $0x54] sm:$0xff]
  %v547 = vld [vmem:[%s2 + $0x5c] sm:$0xf]
  %v548 = vld [vmem:[%s2 + $0x60] sm:$0xff]
  %v549 = vld [vmem:[%s2 + $0x68] sm:$0xf]
  %v550 = vld [vmem:[%s2 + $0x6c] sm:$0xff]
  %v551 = vld [vmem:[%s2 + $0x74] sm:$0xf]
  %v552 = vld [vmem:[%s2 + $0x78] sm:$0xff]
  %v553 = vld [vmem:[%s2 + $0x80] sm:$0xf]
  %v554 = vld [vmem:[%s2 + $0x84] sm:$0xff]
  %v555 = vld [vmem:[%s2 + $0x8c] sm:$0xf]
  %v556 = vld [vmem:[%s2 + $0x90] sm:$0xff]
  %v557 = vld [vmem:[%s2 + $0x98] sm:$0xf]
  %v558 = vld [vmem:[%s2 + $0x9c] sm:$0xff]
  %v559 = vld [vmem:[%s2 + $0xa4] sm:$0xf]
  %v560 = vld [vmem:[%s2 + $0xa8] sm:$0xff]
  %v561 = vld [vmem:[%s2 + $0xb0] sm:$0xf]
  %v562 = vld [vmem:[%s2 + $0xb4] sm:$0xff]
  %v563 = vld [vmem:[%s2 + $0xbc] sm:$0xf]
  %v596 = vunpack.c.l.b16 %v532
  %v597 = vunpack.c.h.b16 %v532
  %v598 = vunpack.c.l.b16 %v533
  %v599 = vunpack.c.l.b16 %v534
  %v600 = vunpack.c.h.b16 %v534
  %v601 = vunpack.c.l.b16 %v535
  %v602 = vunpack.c.l.b16 %v536
  %v603 = vunpack.c.h.b16 %v536
  %v604 = vunpack.c.l.b16 %v537
  %v605 = vunpack.c.l.b16 %v538
  %v606 = vunpack.c.h.b16 %v538
  %v607 = vunpack.c.l.b16 %v539
  %v608 = vunpack.c.l.b16 %v540
  %v609 = vunpack.c.h.b16 %v540
  %v610 = vunpack.c.l.b16 %v541
  %v611 = vunpack.c.l.b16 %v542
  %v612 = vunpack.c.h.b16 %v542
  %v613 = vunpack.c.l.b16 %v543
  %v614 = vunpack.c.l.b16 %v544
  %v615 = vunpack.c.h.b16 %v544
  %v616 = vunpack.c.l.b16 %v545
  %v617 = vunpack.c.l.b16 %v546
  %v618 = vunpack.c.h.b16 %v546
  %v619 = vunpack.c.l.b16 %v547
  %v620 = vunpack.c.l.b16 %v548
  %v621 = vunpack.c.h.b16 %v548
  %v622 = vunpack.c.l.b16 %v549
  %v623 = vunpack.c.l.b16 %v550
  %v624 = vunpack.c.h.b16 %v550
  %v625 = vunpack.c.l.b16 %v551
  %v626 = vunpack.c.l.b16 %v552
  %v627 = vunpack.c.h.b16 %v552
  %v628 = vunpack.c.l.b16 %v553
  %v629 = vunpack.c.l.b16 %v554
  %v630 = vunpack.c.h.b16 %v554
  %v631 = vunpack.c.l.b16 %v555
  %v632 = vunpack.c.l.b16 %v556
  %v633 = vunpack.c.h.b16 %v556
  %v634 = vunpack.c.l.b16 %v557
  %v635 = vunpack.c.l.b16 %v558
  %v636 = vunpack.c.h.b16 %v558
  %v637 = vunpack.c.l.b16 %v559
  %v638 = vunpack.c.l.b16 %v560
  %v639 = vunpack.c.h.b16 %v560
  %v640 = vunpack.c.l.b16 %v561
  %v641 = vunpack.c.l.b16 %v562
  %v642 = vunpack.c.h.b16 %v562
  %v643 = vunpack.c.l.b16 %v563
  %v644 = vpack.c.b16 %v599, %v596
  %v645 = vpack.c.b16 %v600, %v597
  %v646 = vpack.c.b16 %v601, %v598
  %v647 = vpack.c.b16 %v605, %v602
  %v648 = vpack.c.b16 %v606, %v603
  %v649 = vpack.c.b16 %v607, %v604
  %v650 = vpack.c.b16 %v611, %v608
  %v651 = vpack.c.b16 %v612, %v609
  %v652 = vpack.c.b16 %v613, %v610
  %v653 = vpack.c.b16 %v617, %v614
  %v654 = vpack.c.b16 %v618, %v615
  %v655 = vpack.c.b16 %v619, %v616
  %v656 = vpack.c.b16 %v623, %v620
  %v657 = vpack.c.b16 %v624, %v621
  %v658 = vpack.c.b16 %v625, %v622
  %v659 = vpack.c.b16 %v629, %v626
  %v660 = vpack.c.b16 %v630, %v627
  %v661 = vpack.c.b16 %v631, %v628
  %v662 = vpack.c.b16 %v635, %v632
  %v663 = vpack.c.b16 %v636, %v633
  %v664 = vpack.c.b16 %v637, %v634
  %v665 = vpack.c.b16 %v641, %v638
  %v666 = vpack.c.b16 %v642, %v639
  %v667 = vpack.c.b16 %v643, %v640
  %692 = vmatprep.subr.bf16.mxu0 %v645
  %693 = vmatpush1.bf16.msra.mxu0 %v644
  %694 = vmatprep.subr.bf16.mxu0 %v648
  %695 = vmatpush1.bf16.msra.mxu0 %v647
  %696 = vmatprep.subr.bf16.mxu0 %v651
  %697 = vmatpush1.bf16.msra.mxu0 %v650
  %698 = vmatprep.subr.bf16.mxu0 %v654
  %699 = vmatpush1.bf16.msra.mxu0 %v653
  %700 = vmatprep.subr.bf16.mxu0 %v657
  %701 = vmatpush1.bf16.msra.mxu0 %v656
  %702 = vmatprep.subr.bf16.mxu0 %v660
  %703 = vmatpush1.bf16.msra.mxu0 %v659
  %704 = vmatprep.subr.bf16.mxu0 %v663
  %705 = vmatpush1.bf16.msra.mxu0 %v662
  %706 = vmatprep.subr.bf16.mxu0 %v666
  %707 = vmatpush1.bf16.msra.mxu0 %v665
  %708 = vmatprep.subr.bf16.mxu0 0
  %709 = vmatpush1.bf16.msra.mxu0 0
  %710 = vmatprep.subr.bf16.mxu0 0
  %711 = vmatpush1.bf16.msra.mxu0 0
  %712 = vmatprep.subr.bf16.mxu0 0
  %713 = vmatpush1.bf16.msra.mxu0 0
  %714 = vmatprep.subr.bf16.mxu0 0
  %715 = vmatpush1.bf16.msra.mxu0 0
  %716 = vmatprep.subr.bf16.mxu0 0
  %717 = vmatpush1.bf16.msra.mxu0 0
  %718 = vmatprep.subr.bf16.mxu0 0
  %719 = vmatpush1.bf16.msra.mxu0 0
  %720 = vmatprep.subr.bf16.mxu0 0
  %721 = vmatpush1.bf16.msra.mxu0 0
  %722 = vmatprep.subr.bf16.mxu0 0
  %723 = vmatpush1.bf16.msra.mxu0 0
  %724 = vmatprep.mubr.bf16.mxu0 0
  %725 = vmatmul.mubr.bf16.gmra.mrb[0].mxu0 %v531
  %v726 = vpop.f32.mrb[0].mxu0
  %v727 = vadd.f32 0.0, %v726
  %v728 = vpop.f32.mrb[0].mxu0
  %v729 = vadd.f32 0.0, %v728
  %v730 = vpop.f32.mrb[0].mxu0
  %v731 = vpop.f32.mrb[0].mxu0
  %732 = vdwg.mxu0
  %733 = vmatprep.subr.bf16.mxu0 0
  %734 = vmatpush1.bf16.msra.mxu0 %v646
  %735 = vmatprep.subr.bf16.mxu0 0
  %736 = vmatpush1.bf16.msra.mxu0 %v649
  %737 = vmatprep.subr.bf16.mxu0 0
  %738 = vmatpush1.bf16.msra.mxu0 %v652
  %739 = vmatprep.subr.bf16.mxu0 0
  %740 = vmatpush1.bf16.msra.mxu0 %v655
  %741 = vmatprep.subr.bf16.mxu0 0
  %742 = vmatpush1.bf16.msra.mxu0 %v658
  %743 = vmatprep.subr.bf16.mxu0 0
  %744 = vmatpush1.bf16.msra.mxu0 %v661
  %745 = vmatprep.subr.bf16.mxu0 0
  %746 = vmatpush1.bf16.msra.mxu0 %v664
  %747 = vmatprep.subr.bf16.mxu0 0
  %748 = vmatpush1.bf16.msra.mxu0 %v667
  %749 = vmatprep.subr.bf16.mxu0 0
  %750 = vmatpush1.bf16.msra.mxu0 0
  %751 = vmatprep.subr.bf16.mxu0 0
  %752 = vmatpush1.bf16.msra.mxu0 0
  %753 = vmatprep.subr.bf16.mxu0 0
  %754 = vmatpush1.bf16.msra.mxu0 0
  %755 = vmatprep.subr.bf16.mxu0 0
  %756 = vmatpush1.bf16.msra.mxu0 0
  %757 = vmatprep.subr.bf16.mxu0 0
  %758 = vmatpush1.bf16.msra.mxu0 0
  %759 = vmatprep.subr.bf16.mxu0 0
  %760 = vmatpush1.bf16.msra.mxu0 0
  %761 = vmatprep.subr.bf16.mxu0 0
  %762 = vmatpush1.bf16.msra.mxu0 0
  %763 = vmatprep.subr.bf16.mxu0 0
  %764 = vmatpush1.bf16.msra.mxu0 0
  %765 = vmatprep.mubr.bf16.mxu0 0
  %766 = vmatmul.mubr.bf16.gmra.mrb[0].mxu0 %v531
  %v767 = vpop.f32.mrb[0].mxu0
  %v768 = vadd.f32 0.0, %v767
  %v769 = vpop.f32.mrb[0].mxu0
  %v770 = vpop.f32.mrb[0].mxu0
  %v771 = vpop.f32.mrb[0].mxu0
  %772 = vdwg.mxu0
  %vm773 = vcmp.gt.f32.partialorder %v727, 0.0
  %vm774 = vcmp.gt.f32.partialorder %v729, 0.0
  %vm775 = vcmp.gt.f32.partialorder %v768, 0.0
  %v776 = vsel %vm773, %v24, 0.0
  %v777 = vsel %vm774, %v32, 0.0
  %v778 = vsel %vm775, %v31, 0.0
  %v782 = vcombine.low %v776, %v777
  %v784 = vunpack.c.l.s4 1983009808
  %v785 = vunpack.c.0.s8 %v784
  %v786 = vlaneseq
  %v787 = vshrl.u32 %v786, 7
  %v788 = vsub.s32 %v785, %v787
  %v789 = vrot.slane %v782, %v788
  %v791 = vunpack.c.l.s4 1983009808
  %v792 = vunpack.c.0.s8 %v791
  %v793 = vlaneseq
  %v794 = vshrl.u32 %v793, 7
  %v795 = vsub.s32 %v792, %v794
  %v796 = vrot.slane %v778, %v795
  %v797 = vcombine.low %v789, %v796
  %vm799 = vcmask 1041408
  %vm800 = vcmask 1043458
  %vm801 = vmor %vm800, %vm799
  %vm802 = vcmask 259076
  %vm803 = vmor %vm802, %vm801
  %804 = vst.msk [vmem:[%s3] sm:$0x3f] %vm803, %v797
  // Predicated region
  $region14: #{_lambda_.3} parent=0 // pred_check
    _
  $region15: #{_lambda_.3} parent=0 // pred_check_branch
    %806 = sbr.rel (0) target = $region17
  $region16: #{_lambda_.3} parent=0 // pred_region
    _
  $region17: #{_lambda_.3} parent=0 // pred_fallthru
    _
  // Predicated region
  $region18: #{_lambda_.3} parent=0 // pred_check
    _
  $region19: #{_lambda_.3} parent=0 // pred_check_branch
    %808 = sbr.rel (0) target = $region21
  $region20: #{_lambda_.3} parent=0 // pred_region
    _
  $region21: #{_lambda_.3} parent=0 // pred_fallthru
    _

</llo_original>
